<compile_context>
chip_gen: v5e
topology: v5e:2x2
jax: 0.10.0
libtpu: 0.0.40
codegen_flags: <defaults>
</compile_context>

<pallas_src>
import jax
import jax.numpy as jnp
from jax.experimental import pallas as pl
from jax.experimental.pallas import tpu as pltpu

# ----- module-consistent (small) sizes -----
H0 = 32                    # hidden_size_0
H1 = 32                    # hidden_size_1
F1 = 3 * H1 // 2           # 48 = inv_1 output features
PRED = 64                  # predlast_hidden_size
OUT_CLASSES = 3
META_SIZE = 27
BN_EPS = 1e-5

VMEM = pl.BlockSpec(memory_space=pltpu.MemorySpace.VMEM)

# rows of the packed parameter-vector table (zero padded to VEC_W columns)
(_R_AP, _R_AN, _R_BMP, _R_BMN, _R_B0R,
 _R_B0C, _R_BI1, _R_B1C, _R_BC1, _R_BC2, _R_BC3) = range(11)
VEC_W = max(4 * H0, 3 * H0, 3 * H1, 3 * F1, 2 * PRED)   # 144


# ---------------------------------------------------------------------------
# Fused kernel: pos/neg/all branches + classifier, whole model in one call.
# ---------------------------------------------------------------------------
def fused_kernel(pos_ref, neg_ref, vec_ref, wmid_ref, w1blk_ref,
                 wc1_ref, wc2_ref, wc3_ref, out_ref):
    xp = pos_ref[...]                                   # (B*N, M)
    xn = neg_ref[...]                                   # (B*N, M)
    BN = xp.shape[0]
    B = out_ref.shape[0]
    N = BN // B

    vp = vec_ref[...]                                   # (11, VEC_W)
    ap_row   = vp[_R_AP:_R_AP + 1,   :4 * H0]           # (1, 128) alpha0 [pos|0|all|0]
    an_row   = vp[_R_AN:_R_AN + 1,   :4 * H0]           # (1, 128) alpha0 [0|neg|0|all]
    bmp_row  = vp[_R_BMP:_R_BMP + 1, :4 * H0]           # (1, 128) mean_pos coeffs
    bmn_row  = vp[_R_BMN:_R_BMN + 1, :4 * H0]           # (1, 128) mean_neg coeffs
    bias0row = vp[_R_B0R:_R_B0R + 1, :4 * H0]           # (1, 128) bias0 per slot
    b0_cat   = vp[_R_B0C:_R_B0C + 1, :3 * H0]           # (1, 96)
    bias1cat = vp[_R_BI1:_R_BI1 + 1, :3 * H1]           # (1, 96)
    b1_cat   = vp[_R_B1C:_R_B1C + 1, :3 * F1]           # (1, 144)
    bc1      = vp[_R_BC1:_R_BC1 + 1, :2 * PRED]         # (1, 128)
    bc2      = vp[_R_BC2:_R_BC2 + 1, :PRED]             # (1, 64)
    bc3      = vp[_R_BC3:_R_BC3 + 1, :OUT_CLASSES]      # (1, 3)

    # --- equiv_0 + ReLU + mean over inner set (M), all 3 branches in one
    #     lane-dense pass. Lane slots (width 4*H0 = 128):
    #     [pos-branch | neg-branch | all-branch(pos half) | all-branch(neg half)]
    mp = jnp.mean(xp, axis=1, keepdims=True)            # (BN, 1)
    mn = jnp.mean(xn, axis=1, keepdims=True)            # (BN, 1)
    cterm = mp * bmp_row + mn * bmn_row + bias0row      # (BN, 128) invariant part
    z = jnp.maximum(
        xp[:, :, None] * ap_row + xn[:, :, None] * an_row + cterm[:, None, :],
        0.0)                                            # (BN, M, 128)
    rm = jnp.mean(z, axis=1)                            # (BN, 128) mean over inner set

    # --- inv_0: block-diag across branches; the 0.5 averaging of the 'all'
    #     halves is folded into w0_eff (prebuilt at param-prep time).
    w0_eff = wmid_ref[0:4 * H0, :]                      # (128, 96)
    w_eq1 = wmid_ref[4 * H0:4 * H0 + 6 * H0, :]         # (192, 96)
    s_cat = jnp.dot(rm, w0_eff,
                    preferred_element_type=jnp.float32) + b0_cat      # (BN, 96)

    # --- equiv_1 + ReLU: concat-K with the outer-set mean, block-diag across branches.
    sm = jnp.mean(s_cat.reshape(B, N, 3 * H0), axis=1)  # (B, 96)
    sm_b = jnp.broadcast_to(sm[:, None, :], (B, N, 3 * H0)).reshape(BN, 3 * H0)
    s_big = jnp.concatenate([s_cat, sm_b], axis=1)      # (BN, 192)
    u_cat = jnp.maximum(
        jnp.dot(s_big, w_eq1, preferred_element_type=jnp.float32) + bias1cat,
        0.0)                                            # (BN, 96)

    # --- inv_1: mean over outer set (N), block-diag -> already the hstacked features.
    um = jnp.mean(u_cat.reshape(B, N, 3 * H1), axis=1)  # (B, 96)
    feat = jnp.dot(um, w1blk_ref[...],
                   preferred_element_type=jnp.float32) + b1_cat        # (B, 144)

    # --- classifier: Linear (BN folded) -> ReLU -> Linear (BN folded) -> ReLU -> Linear
    h = jnp.maximum(jnp.dot(feat, wc1_ref[...],
                            preferred_element_type=jnp.float32) + bc1, 0.0)
    h = jnp.maximum(jnp.dot(h, wc2_ref[...],
                            preferred_element_type=jnp.float32) + bc2, 0.0)
    out_ref[...] = jnp.dot(h, wc3_ref[...],
                           preferred_element_type=jnp.float32) + bc3   # (B, 3)


def _fused_call(packed, pos2, neg2, batch):
    return pl.pallas_call(
        fused_kernel,
        out_shape=jax.ShapeDtypeStruct((batch, OUT_CLASSES), jnp.float32),
        in_specs=[VMEM] * 8,
        out_specs=VMEM,
    )(pos2, neg2, packed["vec_pack"], packed["w_mid"], packed["w1_blk"],
      packed["wc1"], packed["wc2"], packed["wc3"])


@jax.jit
def forward(packed, pos, neg, y):
    del y  # meta vector is reshaped but never used in the original forward
    B, N, M = pos.shape
    return _fused_call(packed, pos.reshape(B * N, M), neg.reshape(B * N, M), B)


# ---------------------------------------------------------------------------
# Raw parameter init (mirrors the torch module layers; eval-mode BN stats 0/1).
# ---------------------------------------------------------------------------
def init_params(key):
    keys = iter(jax.random.split(key, 64))

    def u(shape, scale=0.2):
        return jax.random.uniform(next(keys), shape, jnp.float32, -scale, scale)

    def branch():
        return dict(
            alpha0=u((1, H0)), beta0=u((1, H0)), bias0=u((1, H0)),      # EquivLinear(1, H0)
            w0_inv=u((H0, H0)), b0_inv=u((1, H0)),                      # InvLinear(H0, H0)
            alpha1=u((H0, H1)), beta1=u((H0, H1)), bias1=u((1, H1)),    # EquivLinear(H0, H1)
            w1_inv=u((H1, F1)), b1_inv=u((1, F1)),                      # InvLinear(H1, 3*H1//2)
        )

    def bn_fold(n):
        gamma = u((1, n)) + 1.0
        beta = u((1, n))
        scale = gamma / jnp.sqrt(1.0 + BN_EPS)   # running_var = 1
        shift = beta                             # running_mean = 0
        return scale, shift

    d_in = 3 * F1
    g1, s1 = bn_fold(2 * PRED)
    g2, s2 = bn_fold(PRED)
    clf = dict(
        w1=u((d_in, 2 * PRED)), b1=u((1, 2 * PRED)), g1=g1, s1=s1,
        w2=u((2 * PRED, PRED)), b2=u((1, PRED)), g2=g2, s2=s2,
        w3=u((PRED, OUT_CLASSES)), b3=u((1, OUT_CLASSES)),
    )
    return dict(pos=branch(), neg=branch(), all=branch(), clf=clf)


# ---------------------------------------------------------------------------
# Parameter prep: fold BN, build block-diag / concat-K weights, pack vectors.
# ---------------------------------------------------------------------------
def pack_params(p):
    pp, pn, pa, c = p["pos"], p["neg"], p["all"], p["clf"]
    z32 = jnp.zeros((1, H0), jnp.float32)

    # equiv_0 lane-slot rows: [pos | neg | all(pos half) | all(neg half)]
    ap_row = jnp.concatenate([pp["alpha0"], z32, pa["alpha0"], z32], axis=1)
    an_row = jnp.concatenate([z32, pn["alpha0"], z32, pa["alpha0"]], axis=1)
    bmp_row = jnp.concatenate([pp["beta0"], z32, 0.5 * pa["beta0"], 0.5 * pa["beta0"]], axis=1)
    bmn_row = jnp.concatenate([z32, pn["beta0"], 0.5 * pa["beta0"], 0.5 * pa["beta0"]], axis=1)
    bias0_row = jnp.concatenate([pp["bias0"], pn["bias0"], pa["bias0"], pa["bias0"]], axis=1)

    b0_cat = jnp.concatenate([pp["b0_inv"], pn["b0_inv"], pa["b0_inv"]], axis=1)
    bias1_cat = jnp.concatenate([pp["bias1"], pn["bias1"], pa["bias1"]], axis=1)
    b1_cat = jnp.concatenate([pp["b1_inv"], pn["b1_inv"], pa["b1_inv"]], axis=1)

    # fold eval-mode BatchNorm into the classifier Linear layers
    wc1 = c["w1"] * c["g1"]
    bc1 = c["b1"] * c["g1"] + c["s1"]
    wc2 = c["w2"] * c["g2"]
    bc2 = c["b2"] * c["g2"] + c["s2"]
    wc3 = c["w3"]
    bc3 = c["b3"]

    def pad_row(v):
        return jnp.pad(v, ((0, 0), (0, VEC_W - v.shape[1])))

    vec_pack = jnp.concatenate(
        [pad_row(v) for v in (ap_row, an_row, bmp_row, bmn_row, bias0_row,
                              b0_cat, bias1_cat, b1_cat, bc1, bc2, bc3)], axis=0)  # (11, 144)

    def blkdiag3(a, b, d):
        r0, c0 = a.shape
        r1, c1 = b.shape
        out = jnp.zeros((r0 + r1 + d.shape[0], c0 + c1 + d.shape[1]), jnp.float32)
        out = out.at[:r0, :c0].set(a)
        out = out.at[r0:r0 + r1, c0:c0 + c1].set(b)
        out = out.at[r0 + r1:, c0 + c1:].set(d)
        return out

    # inv_0: block-diag across branches; 'all' branch's two half-means folded as 0.5*W0_all
    w0_eff = jnp.zeros((4 * H0, 3 * H0), jnp.float32)
    w0_eff = w0_eff.at[0:H0, 0:H0].set(pp["w0_inv"])
    w0_eff = w0_eff.at[H0:2 * H0, H0:2 * H0].set(pn["w0_inv"])
    w0_eff = w0_eff.at[2 * H0:3 * H0, 2 * H0:3 * H0].set(0.5 * pa["w0_inv"])
    w0_eff = w0_eff.at[3 * H0:4 * H0, 2 * H0:3 * H0].set(0.5 * pa["w0_inv"])

    # equiv_1: concat-K weight = [block_diag(alpha1); block_diag(beta1)]
    w_eq1 = jnp.concatenate(
        [blkdiag3(pp["alpha1"], pn["alpha1"], pa["alpha1"]),
         blkdiag3(pp["beta1"], pn["beta1"], pa["beta1"])], axis=0)      # (192, 96)

    w_mid = jnp.concatenate([w0_eff, w_eq1], axis=0)                    # (320, 96)
    w1_blk = blkdiag3(pp["w1_inv"], pn["w1_inv"], pa["w1_inv"])         # (96, 144)

    return dict(vec_pack=vec_pack, w_mid=w_mid, w1_blk=w1_blk,
                wc1=wc1, wc2=wc2, wc3=wc3)


# ---------------------------------------------------------------------------
# Pure-JAX reference (mirrors the torch module math) for a correctness check.
# ---------------------------------------------------------------------------
def _equiv_ref(x, alpha, beta, bias):
    h_inv = jnp.mean(x, axis=1) @ beta + bias
    return x @ alpha + h_inv[:, None, :]


def _inv_ref(x, beta, bias):
    return jnp.mean(x, axis=1) @ beta + bias


def _branch_ref(x, p):
    B, N, M = x.shape
    z = x.reshape(B * N, M, 1)
    z = jnp.maximum(_equiv_ref(z, p["alpha0"], p["beta0"], p["bias0"]), 0.0)
    z = _inv_ref(z, p["w0_inv"], p["b0_inv"]).reshape(B, N, H0)
    z = jnp.maximum(_equiv_ref(z, p["alpha1"], p["beta1"], p["bias1"]), 0.0)
    return _inv_ref(z, p["w1_inv"], p["b1_inv"])


def forward_ref(params, pos, neg, y):
    del y
    pv = _branch_ref(pos, params["pos"])
    nv = _branch_ref(neg, params["neg"])
    av = _branch_ref(jnp.concatenate([pos, neg], axis=2), params["all"])
    x = jnp.concatenate([pv, nv, av], axis=1)
    c = params["clf"]
    h = jnp.maximum((x @ c["w1"] + c["b1"]) * c["g1"] + c["s1"], 0.0)
    h = jnp.maximum((h @ c["w2"] + c["b2"]) * c["g2"] + c["s2"], 0.0)
    return h @ c["w3"] + c["b3"]


if __name__ == "__main__":
    key = jax.random.PRNGKey(0)
    kp, kn, ky, kparams = jax.random.split(key, 4)

    B, N, M = 2, 8, 16          # (batch, features, instances) — small
    pos = jax.random.normal(kp, (B, N, M), jnp.float32)
    neg = jax.random.normal(kn, (B, N, M), jnp.float32)
    y = jax.random.normal(ky, (B, META_SIZE), jnp.float32)

    raw_params = init_params(kparams)
    packed = pack_params(raw_params)

    out = jax.block_until_ready(forward(packed, pos, neg, y))
    ref = forward_ref(raw_params, pos, neg, y)

    assert out.shape == (B, OUT_CLASSES)
    assert jnp.allclose(out, ref, rtol=1e-4, atol=1e-4), (out, ref)

    print("KERNEL_OK")
</pallas_src>

<mosaic_0001>
module attributes {stable_mosaic.version = 11 : i64} {
  func.func @fused_kernel(%arg0: memref<16x16xf32, #tpu.memory_space<vmem>>, %arg1: memref<16x16xf32, #tpu.memory_space<vmem>>, %arg2: memref<11x144xf32, #tpu.memory_space<vmem>>, %arg3: memref<320x96xf32, #tpu.memory_space<vmem>>, %arg4: memref<96x144xf32, #tpu.memory_space<vmem>>, %arg5: memref<144x128xf32, #tpu.memory_space<vmem>>, %arg6: memref<128x64xf32, #tpu.memory_space<vmem>>, %arg7: memref<64x3xf32, #tpu.memory_space<vmem>>, %arg8: memref<2x3xf32, #tpu.memory_space<vmem>>) attributes {dimension_semantics = [], scalar_prefetch = 0 : i64, scratch_operands = 0 : i64, tpu.core_type = #tpu.core_type<tc>} {
    %c0 = arith.constant 0 : index
    %c0_0 = arith.constant 0 : index
    %0 = vector.load %arg0[%c0, %c0_0] : memref<16x16xf32, #tpu.memory_space<vmem>>, vector<16x16xf32>
    %c0_1 = arith.constant 0 : index
    %c0_2 = arith.constant 0 : index
    %1 = vector.load %arg1[%c0_1, %c0_2] : memref<16x16xf32, #tpu.memory_space<vmem>>, vector<16x16xf32>
    %c0_3 = arith.constant 0 : index
    %c0_4 = arith.constant 0 : index
    %2 = vector.load %arg2[%c0_3, %c0_4] : memref<11x144xf32, #tpu.memory_space<vmem>>, vector<11x144xf32>
    %3 = vector.extract_strided_slice %2 {offsets = [0, 0], sizes = [1, 128], strides = [1, 1]} : vector<11x144xf32> to vector<1x128xf32>
    %4 = vector.extract_strided_slice %2 {offsets = [1, 0], sizes = [1, 128], strides = [1, 1]} : vector<11x144xf32> to vector<1x128xf32>
    %5 = vector.extract_strided_slice %2 {offsets = [2, 0], sizes = [1, 128], strides = [1, 1]} : vector<11x144xf32> to vector<1x128xf32>
    %6 = vector.extract_strided_slice %2 {offsets = [3, 0], sizes = [1, 128], strides = [1, 1]} : vector<11x144xf32> to vector<1x128xf32>
    %7 = vector.extract_strided_slice %2 {offsets = [4, 0], sizes = [1, 128], strides = [1, 1]} : vector<11x144xf32> to vector<1x128xf32>
    %8 = vector.extract_strided_slice %2 {offsets = [5, 0], sizes = [1, 96], strides = [1, 1]} : vector<11x144xf32> to vector<1x96xf32>
    %9 = vector.extract_strided_slice %2 {offsets = [6, 0], sizes = [1, 96], strides = [1, 1]} : vector<11x144xf32> to vector<1x96xf32>
    %10 = vector.extract_strided_slice %2 {offsets = [7, 0], sizes = [1, 144], strides = [1, 1]} : vector<11x144xf32> to vector<1x144xf32>
    %11 = vector.extract_strided_slice %2 {offsets = [8, 0], sizes = [1, 128], strides = [1, 1]} : vector<11x144xf32> to vector<1x128xf32>
    %12 = vector.extract_strided_slice %2 {offsets = [9, 0], sizes = [1, 64], strides = [1, 1]} : vector<11x144xf32> to vector<1x64xf32>
    %13 = vector.extract_strided_slice %2 {offsets = [10, 0], sizes = [1, 3], strides = [1, 1]} : vector<11x144xf32> to vector<1x3xf32>
    %cst = arith.constant dense<0.000000e+00> : vector<16xf32>
    %14 = vector.multi_reduction <add>, %0, %cst [1] : vector<16x16xf32> to vector<16xf32>
    %15 = vector.shape_cast %14 : vector<16xf32> to vector<16x1xf32>
    %cst_5 = arith.constant 1.600000e+01 : f32
    %16 = vector.broadcast %cst_5 : f32 to vector<16x1xf32>
    %17 = arith.divf %15, %16 : vector<16x1xf32>
    %cst_6 = arith.constant dense<0.000000e+00> : vector<16xf32>
    %18 = vector.multi_reduction <add>, %1, %cst_6 [1] : vector<16x16xf32> to vector<16xf32>
    %19 = vector.shape_cast %18 : vector<16xf32> to vector<16x1xf32>
    %cst_7 = arith.constant 1.600000e+01 : f32
    %20 = vector.broadcast %cst_7 : f32 to vector<16x1xf32>
    %21 = arith.divf %19, %20 : vector<16x1xf32>
    %22 = vector.broadcast %17 : vector<16x1xf32> to vector<16x128xf32>
    %23 = vector.broadcast %5 : vector<1x128xf32> to vector<16x128xf32>
    %24 = arith.mulf %22, %23 : vector<16x128xf32>
    %25 = vector.broadcast %21 : vector<16x1xf32> to vector<16x128xf32>
    %26 = vector.broadcast %6 : vector<1x128xf32> to vector<16x128xf32>
    %27 = arith.mulf %25, %26 : vector<16x128xf32>
    %28 = arith.addf %24, %27 : vector<16x128xf32>
    %29 = vector.broadcast %7 : vector<1x128xf32> to vector<16x128xf32>
    %30 = arith.addf %28, %29 : vector<16x128xf32>
    %31 = vector.shape_cast %0 : vector<16x16xf32> to vector<16x16x1xf32>
    %32 = vector.shape_cast %3 : vector<1x128xf32> to vector<1x1x128xf32>
    %33 = vector.broadcast %31 : vector<16x16x1xf32> to vector<16x16x128xf32>
    %34 = vector.broadcast %32 : vector<1x1x128xf32> to vector<16x16x128xf32>
    %35 = arith.mulf %33, %34 : vector<16x16x128xf32>
    %36 = vector.shape_cast %1 : vector<16x16xf32> to vector<16x16x1xf32>
    %37 = vector.shape_cast %4 : vector<1x128xf32> to vector<1x1x128xf32>
    %38 = vector.broadcast %36 : vector<16x16x1xf32> to vector<16x16x128xf32>
    %39 = vector.broadcast %37 : vector<1x1x128xf32> to vector<16x16x128xf32>
    %40 = arith.mulf %38, %39 : vector<16x16x128xf32>
    %41 = arith.addf %35, %40 : vector<16x16x128xf32>
    %42 = vector.shape_cast %30 : vector<16x128xf32> to vector<16x1x128xf32>
    %43 = vector.broadcast %42 : vector<16x1x128xf32> to vector<16x16x128xf32>
    %44 = arith.addf %41, %43 : vector<16x16x128xf32>
    %cst_8 = arith.constant 0.000000e+00 : f32
    %45 = vector.broadcast %cst_8 : f32 to vector<16x16x128xf32>
    %46 = arith.maximumf %44, %45 : vector<16x16x128xf32>
    %cst_9 = arith.constant dense<0.000000e+00> : vector<16x128xf32>
    %47 = vector.multi_reduction <add>, %46, %cst_9 [1] : vector<16x16x128xf32> to vector<16x128xf32>
    %cst_10 = arith.constant 1.600000e+01 : f32
    %48 = vector.broadcast %cst_10 : f32 to vector<16x128xf32>
    %49 = arith.divf %47, %48 : vector<16x128xf32>
    %c0_11 = arith.constant 0 : index
    %c0_12 = arith.constant 0 : index
    %50 = vector.load %arg3[%c0_11, %c0_12] : memref<320x96xf32, #tpu.memory_space<vmem>>, vector<128x96xf32>
    %c128 = arith.constant 128 : index
    %c0_13 = arith.constant 0 : index
    %51 = vector.load %arg3[%c128, %c0_13] : memref<320x96xf32, #tpu.memory_space<vmem>>, vector<192x96xf32>
    %cst_14 = arith.constant dense<0.000000e+00> : vector<16x96xf32>
    %52 = tpu.matmul %49, %50, %cst_14 {dimension_numbers = #tpu.dot_dimension_numbers<[1], [0], [0], [1], [0, 0, 1, 1], [], []>} : vector<16x128xf32>, vector<128x96xf32>, vector<16x96xf32> -> vector<16x96xf32>
    %53 = vector.broadcast %8 : vector<1x96xf32> to vector<16x96xf32>
    %54 = arith.addf %52, %53 : vector<16x96xf32>
    %55 = vector.shape_cast %54 : vector<16x96xf32> to vector<2x8x96xf32>
    %cst_15 = arith.constant dense<0.000000e+00> : vector<2x96xf32>
    %56 = vector.multi_reduction <add>, %55, %cst_15 [1] : vector<2x8x96xf32> to vector<2x96xf32>
    %cst_16 = arith.constant 8.000000e+00 : f32
    %57 = vector.broadcast %cst_16 : f32 to vector<2x96xf32>
    %58 = arith.divf %56, %57 : vector<2x96xf32>
    %59 = vector.shape_cast %58 : vector<2x96xf32> to vector<2x1x96xf32>
    %60 = vector.shape_cast %59 : vector<2x1x96xf32> to vector<2x1x96xf32>
    %61 = vector.broadcast %60 : vector<2x1x96xf32> to vector<2x8x96xf32>
    %62 = vector.shape_cast %61 : vector<2x8x96xf32> to vector<16x96xf32>
    %63 = tpu.concatenate %54, %62 in 1 : vector<16x96xf32>, vector<16x96xf32> -> vector<16x192xf32>
    %cst_17 = arith.constant dense<0.000000e+00> : vector<16x96xf32>
    %64 = tpu.matmul %63, %51, %cst_17 {dimension_numbers = #tpu.dot_dimension_numbers<[1], [0], [0], [1], [0, 0, 1, 1], [], []>} : vector<16x192xf32>, vector<192x96xf32>, vector<16x96xf32> -> vector<16x96xf32>
    %65 = vector.broadcast %9 : vector<1x96xf32> to vector<16x96xf32>
    %66 = arith.addf %64, %65 : vector<16x96xf32>
    %cst_18 = arith.constant 0.000000e+00 : f32
    %67 = vector.broadcast %cst_18 : f32 to vector<16x96xf32>
    %68 = arith.maximumf %66, %67 : vector<16x96xf32>
    %69 = vector.shape_cast %68 : vector<16x96xf32> to vector<2x8x96xf32>
    %cst_19 = arith.constant dense<0.000000e+00> : vector<2x96xf32>
    %70 = vector.multi_reduction <add>, %69, %cst_19 [1] : vector<2x8x96xf32> to vector<2x96xf32>
    %cst_20 = arith.constant 8.000000e+00 : f32
    %71 = vector.broadcast %cst_20 : f32 to vector<2x96xf32>
    %72 = arith.divf %70, %71 : vector<2x96xf32>
    %c0_21 = arith.constant 0 : index
    %c0_22 = arith.constant 0 : index
    %73 = vector.load %arg4[%c0_21, %c0_22] : memref<96x144xf32, #tpu.memory_space<vmem>>, vector<96x144xf32>
    %cst_23 = arith.constant dense<0.000000e+00> : vector<2x144xf32>
    %74 = tpu.matmul %72, %73, %cst_23 {dimension_numbers = #tpu.dot_dimension_numbers<[1], [0], [0], [1], [0, 0, 1, 1], [], []>} : vector<2x96xf32>, vector<96x144xf32>, vector<2x144xf32> -> vector<2x144xf32>
    %75 = vector.broadcast %10 : vector<1x144xf32> to vector<2x144xf32>
    %76 = arith.addf %74, %75 : vector<2x144xf32>
    %c0_24 = arith.constant 0 : index
    %c0_25 = arith.constant 0 : index
    %77 = vector.load %arg5[%c0_24, %c0_25] : memref<144x128xf32, #tpu.memory_space<vmem>>, vector<144x128xf32>
    %cst_26 = arith.constant dense<0.000000e+00> : vector<2x128xf32>
    %78 = tpu.matmul %76, %77, %cst_26 {dimension_numbers = #tpu.dot_dimension_numbers<[1], [0], [0], [1], [0, 0, 1, 1], [], []>} : vector<2x144xf32>, vector<144x128xf32>, vector<2x128xf32> -> vector<2x128xf32>
    %79 = vector.broadcast %11 : vector<1x128xf32> to vector<2x128xf32>
    %80 = arith.addf %78, %79 : vector<2x128xf32>
    %cst_27 = arith.constant 0.000000e+00 : f32
    %81 = vector.broadcast %cst_27 : f32 to vector<2x128xf32>
    %82 = arith.maximumf %80, %81 : vector<2x128xf32>
    %c0_28 = arith.constant 0 : index
    %c0_29 = arith.constant 0 : index
    %83 = vector.load %arg6[%c0_28, %c0_29] : memref<128x64xf32, #tpu.memory_space<vmem>>, vector<128x64xf32>
    %cst_30 = arith.constant dense<0.000000e+00> : vector<2x64xf32>
    %84 = tpu.matmul %82, %83, %cst_30 {dimension_numbers = #tpu.dot_dimension_numbers<[1], [0], [0], [1], [0, 0, 1, 1], [], []>} : vector<2x128xf32>, vector<128x64xf32>, vector<2x64xf32> -> vector<2x64xf32>
    %85 = vector.broadcast %12 : vector<1x64xf32> to vector<2x64xf32>
    %86 = arith.addf %84, %85 : vector<2x64xf32>
    %cst_31 = arith.constant 0.000000e+00 : f32
    %87 = vector.broadcast %cst_31 : f32 to vector<2x64xf32>
    %88 = arith.maximumf %86, %87 : vector<2x64xf32>
    %c0_32 = arith.constant 0 : index
    %c0_33 = arith.constant 0 : index
    %89 = vector.load %arg7[%c0_32, %c0_33] : memref<64x3xf32, #tpu.memory_space<vmem>>, vector<64x3xf32>
    %cst_34 = arith.constant dense<0.000000e+00> : vector<2x3xf32>
    %90 = tpu.matmul %88, %89, %cst_34 {dimension_numbers = #tpu.dot_dimension_numbers<[1], [0], [0], [1], [0, 0, 1, 1], [], []>} : vector<2x64xf32>, vector<64x3xf32>, vector<2x3xf32> -> vector<2x3xf32>
    %91 = vector.broadcast %13 : vector<1x3xf32> to vector<2x3xf32>
    %92 = arith.addf %90, %91 : vector<2x3xf32>
    %c0_35 = arith.constant 0 : index
    %c0_36 = arith.constant 0 : index
    %93 = vector.load %arg8[%c0_35, %c0_36] : memref<2x3xf32, #tpu.memory_space<vmem>>, vector<2x3xf32>
    tpu.vector_store %arg8[%c0_35, %c0_36], %92 {strides = array<i32>} : memref<2x3xf32, #tpu.memory_space<vmem>>, vector<2x3xf32>,
    return
  }
}

</mosaic_0001>

<llo_original>
// kernel: forward.1
$region0: #{forward.1}
  #allocation0 [shape = 'u32[]', space=smem, size = 0x4, offset = 0x4, fixed_abs, tag = 'smem constant byte address 0x4 - core index']
  #allocation1 [shape = 'u32[72,128]{1,0:T(1,128)}', space=vmem, size = 0x9000, scoped, tag = 'internal scratch']
  %s0 = inlined_call_operand.vmem [shape: f32[16,16], index: 0, kind: input, shape index: {}]
  %s1 = inlined_call_operand.vmem [shape: f32[16,16], index: 1, kind: input, shape index: {}]
  %s2 = inlined_call_operand.vmem [shape: f32[11,144], index: 2, kind: input, shape index: {}]
  %s3 = inlined_call_operand.vmem [shape: f32[320,96], index: 3, kind: input, shape index: {}]
  %s4 = inlined_call_operand.vmem [shape: f32[96,144], index: 4, kind: input, shape index: {}]
  %s5 = inlined_call_operand.vmem [shape: f32[144,128], index: 5, kind: input, shape index: {}]
  %s6 = inlined_call_operand.vmem [shape: f32[128,64], index: 6, kind: input, shape index: {}]
  %s7 = inlined_call_operand.vmem [shape: f32[64,3], index: 7, kind: input, shape index: {}]
  %s8 = inlined_call_operand.hbm [shape: f32[2,3], index: 8, kind: output, shape index: {}]
  %s9 = sld [smem:[#allocation0]]
  $region42: #{forward.1} parent=0
    _
  %s11 = ssub.s32 1, %s9
  %s12 = scalar_select 0, %s11, %s9
  $region1: #{forward.1} parent=0
    #allocation2 [shape = 'u8[1024]{0}', space=vmem, size = 0x400, scoped, tag = 'output window, operand 0, single buffered']
    #allocation3 [shape = 's32[1]{0}', space=sflag, size = 0x4, scoped, tag = 'scoped memory for forward.1']
    %13 = vsyncpa [#allocation3], 0
    // Predicated region
    $region2: #{forward.1} parent=1 // pred_check
      _
    $region3: #{forward.1} parent=1 // pred_check_branch
      %15 = sbr.rel (0) target = $region5
    $region4: #{forward.1} parent=1 // pred_region
      _
    $region5: #{forward.1} parent=1 // pred_fallthru
      _
    // Predicated region
    $region6: #{forward.1} parent=1 // pred_check
      _
    $region7: #{forward.1} parent=1 // pred_check_branch
      %17 = sbr.rel (0) target = $region9
    $region8: #{forward.1} parent=1 // pred_region
      _
    $region9: #{forward.1} parent=1 // pred_fallthru
      _
    // Predicated region
    $region10: #{forward.1} parent=1 // pred_check
      _
    $region11: #{forward.1} parent=1 // pred_check_branch
      %19 = sbr.rel (0) target = $region13
    $region12: #{forward.1} parent=1 // pred_region
      _
    $region13: #{forward.1} parent=1 // pred_fallthru
      _
    // Predicated region
    $region14: #{forward.1} parent=1 // pred_check
      _
    $region15: #{forward.1} parent=1 // pred_check_branch
      %21 = sbr.rel (0) target = $region17
    $region16: #{forward.1} parent=1 // pred_region
      _
    $region17: #{forward.1} parent=1 // pred_fallthru
      _
    // Predicated region
    $region18: #{forward.1} parent=1 // pred_check
      _
    $region19: #{forward.1} parent=1 // pred_check_branch
      %23 = sbr.rel (0) target = $region21
    $region20: #{forward.1} parent=1 // pred_region
      _
    $region21: #{forward.1} parent=1 // pred_fallthru
      _
    // Predicated region
    $region22: #{forward.1} parent=1 // pred_check
      _
    $region23: #{forward.1} parent=1 // pred_check_branch
      %25 = sbr.rel (0) target = $region25
    $region24: #{forward.1} parent=1 // pred_region
      _
    $region25: #{forward.1} parent=1 // pred_fallthru
      _
    // Predicated region
    $region26: #{forward.1} parent=1 // pred_check
      _
    $region27: #{forward.1} parent=1 // pred_check_branch
      %27 = sbr.rel (0) target = $region29
    $region28: #{forward.1} parent=1 // pred_region
      _
    $region29: #{forward.1} parent=1 // pred_fallthru
      _
    // Predicated region
    $region30: #{forward.1} parent=1 // pred_check
      _
    $region31: #{forward.1} parent=1 // pred_check_branch
      %29 = sbr.rel (0) target = $region33
    $region32: #{forward.1} parent=1 // pred_region
      _
    $region33: #{forward.1} parent=1 // pred_fallthru
      _
    %v30 = vld [vmem:[%s0] sm:$0xff]
    %v31 = vld [vmem:[%s0 + $0x8] sm:$0xff]
    %v32 = vld [vmem:[%s1] sm:$0xff]
    %v33 = vld [vmem:[%s1 + $0x8] sm:$0xff]
    %v34 = vld [vmem:[%s2] sm:$0xff]
    %v35 = vld [vmem:[%s2 + $0x8] sm:$0xff]
    %v36 = vld [vmem:[%s2 + $0x10] sm:$0x7]
    %vm37 = vcmask 130048
    %v38 = vsel %vm37, %v30, 0.0
    %39 = vadd.xlane.f32.xlu0 %v38
    %v40 = vpop.xlane.xlu0 %39
    %v41 = vsel %vm37, %v31, 0.0
    %42 = vadd.xlane.f32.xlu0 %v41
    %v43 = vpop.xlane.xlu0 %42
    %v44 = vrcp.pop 16.0
    %v45 = vmul.f32 16.0, %v44
    %v46 = vsub.f32 1.0, %v45
    %v47 = vmul.f32 %v44, %v46
    %v48 = vadd.f32 %v44, %v47
    %vm49 = vweird.f32 %v44
    %v50 = vsel %vm49, %v44, %v48
    %v51 = vmul.f32 %v40, %v50
    %v52 = vmul.f32 %v43, %v50
    %v53 = vsel %vm37, %v32, 0.0
    %54 = vadd.xlane.f32.xlu0 %v53
    %v55 = vpop.xlane.xlu0 %54
    %v56 = vsel %vm37, %v33, 0.0
    %57 = vadd.xlane.f32.xlu0 %v56
    %v58 = vpop.xlane.xlu0 %57
    %v59 = vmul.f32 %v55, %v50
    %v60 = vmul.f32 %v58, %v50
    %v61 = vperm.slane %v34, 2
    %v62 = vmul.f32 %v51, %v61
    %v63 = vmul.f32 %v52, %v61
    %v64 = vperm.slane %v34, 3
    %v65 = vmul.f32 %v59, %v64
    %v66 = vmul.f32 %v60, %v64
    %v67 = vadd.f32 %v62, %v65
    %v68 = vadd.f32 %v63, %v66
    %v69 = vperm.slane %v34, 4
    %v70 = vadd.f32 %v67, %v69
    %v71 = vadd.f32 %v68, %v69
    %v72 = vperm.slane %v30, 0
    %v73 = vlaneseq
    %v74 = vshrl.u32 %v73, 7
    %76 = vset.pattern.permute.xlu0 %v74
    %77 = vperm.xlu0 %76, %v72
    %v78 = vpop.permute.xlu0 %77
    %v79 = vlaneseq
    %v80 = vshrl.u32 %v79, 7
    %v81 = vadd.s32 %v80, 8
    %82 = vset.pattern.permute.xlu0 %v81
    %83 = vperm.xlu0 %82, %v72
    %v84 = vpop.permute.xlu0 %83
    %v85 = vperm.slane %v30, 1
    %v86 = vlaneseq
    %v87 = vshrl.u32 %v86, 7
    %89 = vset.pattern.permute.xlu0 %v87
    %90 = vperm.xlu0 %89, %v85
    %v91 = vpop.permute.xlu0 %90
    %v92 = vlaneseq
    %v93 = vshrl.u32 %v92, 7
    %v94 = vadd.s32 %v93, 8
    %95 = vset.pattern.permute.xlu0 %v94
    %96 = vperm.xlu0 %95, %v85
    %v97 = vpop.permute.xlu0 %96
    %v98 = vperm.slane %v30, 2
    %v99 = vlaneseq
    %v100 = vshrl.u32 %v99, 7
    %102 = vset.pattern.permute.xlu0 %v100
    %103 = vperm.xlu0 %102, %v98
    %v104 = vpop.permute.xlu0 %103
    %v105 = vlaneseq
    %v106 = vshrl.u32 %v105, 7
    %v107 = vadd.s32 %v106, 8
    %108 = vset.pattern.permute.xlu0 %v107
    %109 = vperm.xlu0 %108, %v98
    %v110 = vpop.permute.xlu0 %109
    %v111 = vperm.slane %v30, 3
    %v112 = vlaneseq
    %v113 = vshrl.u32 %v112, 7
    %115 = vset.pattern.permute.xlu0 %v113
    %116 = vperm.xlu0 %115, %v111
    %v117 = vpop.permute.xlu0 %116
    %v118 = vlaneseq
    %v119 = vshrl.u32 %v118, 7
    %v120 = vadd.s32 %v119, 8
    %121 = vset.pattern.permute.xlu0 %v120
    %122 = vperm.xlu0 %121, %v111
    %v123 = vpop.permute.xlu0 %122
    %v124 = vperm.slane %v30, 4
    %v125 = vlaneseq
    %v126 = vshrl.u32 %v125, 7
    %128 = vset.pattern.permute.xlu0 %v126
    %129 = vperm.xlu0 %128, %v124
    %v130 = vpop.permute.xlu0 %129
    %v131 = vlaneseq
    %v132 = vshrl.u32 %v131, 7
    %v133 = vadd.s32 %v132, 8
    %134 = vset.pattern.permute.xlu0 %v133
    %135 = vperm.xlu0 %134, %v124
    %v136 = vpop.permute.xlu0 %135
    %v137 = vperm.slane %v30, 5
    %v138 = vlaneseq
    %v139 = vshrl.u32 %v138, 7
    %141 = vset.pattern.permute.xlu0 %v139
    %142 = vperm.xlu0 %141, %v137
    %v143 = vpop.permute.xlu0 %142
    %v144 = vlaneseq
    %v145 = vshrl.u32 %v144, 7
    %v146 = vadd.s32 %v145, 8
    %147 = vset.pattern.permute.xlu0 %v146
    %148 = vperm.xlu0 %147, %v137
    %v149 = vpop.permute.xlu0 %148
    %v150 = vperm.slane %v30, 6
    %v151 = vlaneseq
    %v152 = vshrl.u32 %v151, 7
    %154 = vset.pattern.permute.xlu0 %v152
    %155 = vperm.xlu0 %154, %v150
    %v156 = vpop.permute.xlu0 %155
    %v157 = vlaneseq
    %v158 = vshrl.u32 %v157, 7
    %v159 = vadd.s32 %v158, 8
    %160 = vset.pattern.permute.xlu0 %v159
    %161 = vperm.xlu0 %160, %v150
    %v162 = vpop.permute.xlu0 %161
    %v163 = vperm.slane %v30, 7
    %v164 = vlaneseq
    %v165 = vshrl.u32 %v164, 7
    %167 = vset.pattern.permute.xlu0 %v165
    %168 = vperm.xlu0 %167, %v163
    %v169 = vpop.permute.xlu0 %168
    %v170 = vlaneseq
    %v171 = vshrl.u32 %v170, 7
    %v172 = vadd.s32 %v171, 8
    %173 = vset.pattern.permute.xlu0 %v172
    %174 = vperm.xlu0 %173, %v163
    %v175 = vpop.permute.xlu0 %174
    %v176 = vperm.slane %v31, 0
    %v177 = vlaneseq
    %v178 = vshrl.u32 %v177, 7
    %180 = vset.pattern.permute.xlu0 %v178
    %181 = vperm.xlu0 %180, %v176
    %v182 = vpop.permute.xlu0 %181
    %v183 = vlaneseq
    %v184 = vshrl.u32 %v183, 7
    %v185 = vadd.s32 %v184, 8
    %186 = vset.pattern.permute.xlu0 %v185
    %187 = vperm.xlu0 %186, %v176
    %v188 = vpop.permute.xlu0 %187
    %v189 = vperm.slane %v31, 1
    %v190 = vlaneseq
    %v191 = vshrl.u32 %v190, 7
    %193 = vset.pattern.permute.xlu0 %v191
    %194 = vperm.xlu0 %193, %v189
    %v195 = vpop.permute.xlu0 %194
    %v196 = vlaneseq
    %v197 = vshrl.u32 %v196, 7
    %v198 = vadd.s32 %v197, 8
    %199 = vset.pattern.permute.xlu0 %v198
    %200 = vperm.xlu0 %199, %v189
    %v201 = vpop.permute.xlu0 %200
    %v202 = vperm.slane %v31, 2
    %v203 = vlaneseq
    %v204 = vshrl.u32 %v203, 7
    %206 = vset.pattern.permute.xlu0 %v204
    %207 = vperm.xlu0 %206, %v202
    %v208 = vpop.permute.xlu0 %207
    %v209 = vlaneseq
    %v210 = vshrl.u32 %v209, 7
    %v211 = vadd.s32 %v210, 8
    %212 = vset.pattern.permute.xlu0 %v211
    %213 = vperm.xlu0 %212, %v202
    %v214 = vpop.permute.xlu0 %213
    %v215 = vperm.slane %v31, 3
    %v216 = vlaneseq
    %v217 = vshrl.u32 %v216, 7
    %219 = vset.pattern.permute.xlu0 %v217
    %220 = vperm.xlu0 %219, %v215
    %v221 = vpop.permute.xlu0 %220
    %v222 = vlaneseq
    %v223 = vshrl.u32 %v222, 7
    %v224 = vadd.s32 %v223, 8
    %225 = vset.pattern.permute.xlu0 %v224
    %226 = vperm.xlu0 %225, %v215
    %v227 = vpop.permute.xlu0 %226
    %v228 = vperm.slane %v31, 4
    %v229 = vlaneseq
    %v230 = vshrl.u32 %v229, 7
    %232 = vset.pattern.permute.xlu0 %v230
    %233 = vperm.xlu0 %232, %v228
    %v234 = vpop.permute.xlu0 %233
    %v235 = vlaneseq
    %v236 = vshrl.u32 %v235, 7
    %v237 = vadd.s32 %v236, 8
    %238 = vset.pattern.permute.xlu0 %v237
    %239 = vperm.xlu0 %238, %v228
    %v240 = vpop.permute.xlu0 %239
    %v241 = vperm.slane %v31, 5
    %v242 = vlaneseq
    %v243 = vshrl.u32 %v242, 7
    %245 = vset.pattern.permute.xlu0 %v243
    %246 = vperm.xlu0 %245, %v241
    %v247 = vpop.permute.xlu0 %246
    %v248 = vlaneseq
    %v249 = vshrl.u32 %v248, 7
    %v250 = vadd.s32 %v249, 8
    %251 = vset.pattern.permute.xlu0 %v250
    %252 = vperm.xlu0 %251, %v241
    %v253 = vpop.permute.xlu0 %252
    %v254 = vperm.slane %v31, 6
    %v255 = vlaneseq
    %v256 = vshrl.u32 %v255, 7
    %258 = vset.pattern.permute.xlu0 %v256
    %259 = vperm.xlu0 %258, %v254
    %v260 = vpop.permute.xlu0 %259
    %v261 = vlaneseq
    %v262 = vshrl.u32 %v261, 7
    %v263 = vadd.s32 %v262, 8
    %264 = vset.pattern.permute.xlu0 %v263
    %265 = vperm.xlu0 %264, %v254
    %v266 = vpop.permute.xlu0 %265
    %v267 = vperm.slane %v31, 7
    %v268 = vlaneseq
    %v269 = vshrl.u32 %v268, 7
    %271 = vset.pattern.permute.xlu0 %v269
    %272 = vperm.xlu0 %271, %v267
    %v273 = vpop.permute.xlu0 %272
    %v274 = vlaneseq
    %v275 = vshrl.u32 %v274, 7
    %v276 = vadd.s32 %v275, 8
    %277 = vset.pattern.permute.xlu0 %v276
    %278 = vperm.xlu0 %277, %v267
    %v279 = vpop.permute.xlu0 %278
    %v280 = vperm.slane %v34, 0
    %v281 = vmul.f32 %v78, %v280
    %v282 = vmul.f32 %v84, %v280
    %v283 = vmul.f32 %v91, %v280
    %v284 = vmul.f32 %v97, %v280
    %v285 = vmul.f32 %v104, %v280
    %v286 = vmul.f32 %v110, %v280
    %v287 = vmul.f32 %v117, %v280
    %v288 = vmul.f32 %v123, %v280
    %v289 = vmul.f32 %v130, %v280
    %v290 = vmul.f32 %v136, %v280
    %v291 = vmul.f32 %v143, %v280
    %v292 = vmul.f32 %v149, %v280
    %v293 = vmul.f32 %v156, %v280
    %v294 = vmul.f32 %v162, %v280
    %v295 = vmul.f32 %v169, %v280
    %v296 = vmul.f32 %v175, %v280
    %v297 = vmul.f32 %v182, %v280
    %v298 = vmul.f32 %v188, %v280
    %v299 = vmul.f32 %v195, %v280
    %v300 = vmul.f32 %v201, %v280
    %v301 = vmul.f32 %v208, %v280
    %v302 = vmul.f32 %v214, %v280
    %v303 = vmul.f32 %v221, %v280
    %v304 = vmul.f32 %v227, %v280
    %v305 = vmul.f32 %v234, %v280
    %v306 = vmul.f32 %v240, %v280
    %v307 = vmul.f32 %v247, %v280
    %v308 = vmul.f32 %v253, %v280
    %v309 = vmul.f32 %v260, %v280
    %v310 = vmul.f32 %v266, %v280
    %v311 = vmul.f32 %v273, %v280
    %v312 = vmul.f32 %v279, %v280
    %v313 = vperm.slane %v32, 0
    %v314 = vlaneseq
    %v315 = vshrl.u32 %v314, 7
    %317 = vset.pattern.permute.xlu0 %v315
    %318 = vperm.xlu0 %317, %v313
    %v319 = vpop.permute.xlu0 %318
    %v320 = vlaneseq
    %v321 = vshrl.u32 %v320, 7
    %v322 = vadd.s32 %v321, 8
    %323 = vset.pattern.permute.xlu0 %v322
    %324 = vperm.xlu0 %323, %v313
    %v325 = vpop.permute.xlu0 %324
    %v326 = vperm.slane %v32, 1
    %v327 = vlaneseq
    %v328 = vshrl.u32 %v327, 7
    %330 = vset.pattern.permute.xlu0 %v328
    %331 = vperm.xlu0 %330, %v326
    %v332 = vpop.permute.xlu0 %331
    %v333 = vlaneseq
    %v334 = vshrl.u32 %v333, 7
    %v335 = vadd.s32 %v334, 8
    %336 = vset.pattern.permute.xlu0 %v335
    %337 = vperm.xlu0 %336, %v326
    %v338 = vpop.permute.xlu0 %337
    %v339 = vperm.slane %v32, 2
    %v340 = vlaneseq
    %v341 = vshrl.u32 %v340, 7
    %343 = vset.pattern.permute.xlu0 %v341
    %344 = vperm.xlu0 %343, %v339
    %v345 = vpop.permute.xlu0 %344
    %v346 = vlaneseq
    %v347 = vshrl.u32 %v346, 7
    %v348 = vadd.s32 %v347, 8
    %349 = vset.pattern.permute.xlu0 %v348
    %350 = vperm.xlu0 %349, %v339
    %v351 = vpop.permute.xlu0 %350
    %v352 = vperm.slane %v32, 3
    %v353 = vlaneseq
    %v354 = vshrl.u32 %v353, 7
    %356 = vset.pattern.permute.xlu0 %v354
    %357 = vperm.xlu0 %356, %v352
    %v358 = vpop.permute.xlu0 %357
    %v359 = vlaneseq
    %v360 = vshrl.u32 %v359, 7
    %v361 = vadd.s32 %v360, 8
    %362 = vset.pattern.permute.xlu0 %v361
    %363 = vperm.xlu0 %362, %v352
    %v364 = vpop.permute.xlu0 %363
    %v365 = vperm.slane %v32, 4
    %v366 = vlaneseq
    %v367 = vshrl.u32 %v366, 7
    %369 = vset.pattern.permute.xlu0 %v367
    %370 = vperm.xlu0 %369, %v365
    %v371 = vpop.permute.xlu0 %370
    %v372 = vlaneseq
    %v373 = vshrl.u32 %v372, 7
    %v374 = vadd.s32 %v373, 8
    %375 = vset.pattern.permute.xlu0 %v374
    %376 = vperm.xlu0 %375, %v365
    %v377 = vpop.permute.xlu0 %376
    %v378 = vperm.slane %v32, 5
    %v379 = vlaneseq
    %v380 = vshrl.u32 %v379, 7
    %382 = vset.pattern.permute.xlu0 %v380
    %383 = vperm.xlu0 %382, %v378
    %v384 = vpop.permute.xlu0 %383
    %v385 = vlaneseq
    %v386 = vshrl.u32 %v385, 7
    %v387 = vadd.s32 %v386, 8
    %388 = vset.pattern.permute.xlu0 %v387
    %389 = vperm.xlu0 %388, %v378
    %v390 = vpop.permute.xlu0 %389
    %v391 = vperm.slane %v32, 6
    %v392 = vlaneseq
    %v393 = vshrl.u32 %v392, 7
    %395 = vset.pattern.permute.xlu0 %v393
    %396 = vperm.xlu0 %395, %v391
    %v397 = vpop.permute.xlu0 %396
    %v398 = vlaneseq
    %v399 = vshrl.u32 %v398, 7
    %v400 = vadd.s32 %v399, 8
    %401 = vset.pattern.permute.xlu0 %v400
    %402 = vperm.xlu0 %401, %v391
    %v403 = vpop.permute.xlu0 %402
    %v404 = vperm.slane %v32, 7
    %v405 = vlaneseq
    %v406 = vshrl.u32 %v405, 7
    %408 = vset.pattern.permute.xlu0 %v406
    %409 = vperm.xlu0 %408, %v404
    %v410 = vpop.permute.xlu0 %409
    %v411 = vlaneseq
    %v412 = vshrl.u32 %v411, 7
    %v413 = vadd.s32 %v412, 8
    %414 = vset.pattern.permute.xlu0 %v413
    %415 = vperm.xlu0 %414, %v404
    %v416 = vpop.permute.xlu0 %415
    %v417 = vperm.slane %v33, 0
    %v418 = vlaneseq
    %v419 = vshrl.u32 %v418, 7
    %421 = vset.pattern.permute.xlu0 %v419
    %422 = vperm.xlu0 %421, %v417
    %v423 = vpop.permute.xlu0 %422
    %v424 = vlaneseq
    %v425 = vshrl.u32 %v424, 7
    %v426 = vadd.s32 %v425, 8
    %427 = vset.pattern.permute.xlu0 %v426
    %428 = vperm.xlu0 %427, %v417
    %v429 = vpop.permute.xlu0 %428
    %v430 = vperm.slane %v33, 1
    %v431 = vlaneseq
    %v432 = vshrl.u32 %v431, 7
    %434 = vset.pattern.permute.xlu0 %v432
    %435 = vperm.xlu0 %434, %v430
    %v436 = vpop.permute.xlu0 %435
    %v437 = vlaneseq
    %v438 = vshrl.u32 %v437, 7
    %v439 = vadd.s32 %v438, 8
    %440 = vset.pattern.permute.xlu0 %v439
    %441 = vperm.xlu0 %440, %v430
    %v442 = vpop.permute.xlu0 %441
    %v443 = vperm.slane %v33, 2
    %v444 = vlaneseq
    %v445 = vshrl.u32 %v444, 7
    %447 = vset.pattern.permute.xlu0 %v445
    %448 = vperm.xlu0 %447, %v443
    %v449 = vpop.permute.xlu0 %448
    %v450 = vlaneseq
    %v451 = vshrl.u32 %v450, 7
    %v452 = vadd.s32 %v451, 8
    %453 = vset.pattern.permute.xlu0 %v452
    %454 = vperm.xlu0 %453, %v443
    %v455 = vpop.permute.xlu0 %454
    %v456 = vperm.slane %v33, 3
    %v457 = vlaneseq
    %v458 = vshrl.u32 %v457, 7
    %460 = vset.pattern.permute.xlu0 %v458
    %461 = vperm.xlu0 %460, %v456
    %v462 = vpop.permute.xlu0 %461
    %v463 = vlaneseq
    %v464 = vshrl.u32 %v463, 7
    %v465 = vadd.s32 %v464, 8
    %466 = vset.pattern.permute.xlu0 %v465
    %467 = vperm.xlu0 %466, %v456
    %v468 = vpop.permute.xlu0 %467
    %v469 = vperm.slane %v33, 4
    %v470 = vlaneseq
    %v471 = vshrl.u32 %v470, 7
    %473 = vset.pattern.permute.xlu0 %v471
    %474 = vperm.xlu0 %473, %v469
    %v475 = vpop.permute.xlu0 %474
    %v476 = vlaneseq
    %v477 = vshrl.u32 %v476, 7
    %v478 = vadd.s32 %v477, 8
    %479 = vset.pattern.permute.xlu0 %v478
    %480 = vperm.xlu0 %479, %v469
    %v481 = vpop.permute.xlu0 %480
    %v482 = vperm.slane %v33, 5
    %v483 = vlaneseq
    %v484 = vshrl.u32 %v483, 7
    %486 = vset.pattern.permute.xlu0 %v484
    %487 = vperm.xlu0 %486, %v482
    %v488 = vpop.permute.xlu0 %487
    %v489 = vlaneseq
    %v490 = vshrl.u32 %v489, 7
    %v491 = vadd.s32 %v490, 8
    %492 = vset.pattern.permute.xlu0 %v491
    %493 = vperm.xlu0 %492, %v482
    %v494 = vpop.permute.xlu0 %493
    %v495 = vperm.slane %v33, 6
    %v496 = vlaneseq
    %v497 = vshrl.u32 %v496, 7
    %499 = vset.pattern.permute.xlu0 %v497
    %500 = vperm.xlu0 %499, %v495
    %v501 = vpop.permute.xlu0 %500
    %v502 = vlaneseq
    %v503 = vshrl.u32 %v502, 7
    %v504 = vadd.s32 %v503, 8
    %505 = vset.pattern.permute.xlu0 %v504
    %506 = vperm.xlu0 %505, %v495
    %v507 = vpop.permute.xlu0 %506
    %v508 = vperm.slane %v33, 7
    %v509 = vlaneseq
    %v510 = vshrl.u32 %v509, 7
    %512 = vset.pattern.permute.xlu0 %v510
    %513 = vperm.xlu0 %512, %v508
    %v514 = vpop.permute.xlu0 %513
    %v515 = vlaneseq
    %v516 = vshrl.u32 %v515, 7
    %v517 = vadd.s32 %v516, 8
    %518 = vset.pattern.permute.xlu0 %v517
    %519 = vperm.xlu0 %518, %v508
    %v520 = vpop.permute.xlu0 %519
    %v521 = vperm.slane %v34, 1
    %v522 = vmul.f32 %v319, %v521
    %v523 = vmul.f32 %v325, %v521
    %v524 = vmul.f32 %v332, %v521
    %v525 = vmul.f32 %v338, %v521
    %v526 = vmul.f32 %v345, %v521
    %v527 = vmul.f32 %v351, %v521
    %v528 = vmul.f32 %v358, %v521
    %v529 = vmul.f32 %v364, %v521
    %v530 = vmul.f32 %v371, %v521
    %v531 = vmul.f32 %v377, %v521
    %v532 = vmul.f32 %v384, %v521
    %v533 = vmul.f32 %v390, %v521
    %v534 = vmul.f32 %v397, %v521
    %v535 = vmul.f32 %v403, %v521
    %v536 = vmul.f32 %v410, %v521
    %v537 = vmul.f32 %v416, %v521
    %v538 = vmul.f32 %v423, %v521
    %v539 = vmul.f32 %v429, %v521
    %v540 = vmul.f32 %v436, %v521
    %v541 = vmul.f32 %v442, %v521
    %v542 = vmul.f32 %v449, %v521
    %v543 = vmul.f32 %v455, %v521
    %v544 = vmul.f32 %v462, %v521
    %v545 = vmul.f32 %v468, %v521
    %v546 = vmul.f32 %v475, %v521
    %v547 = vmul.f32 %v481, %v521
    %v548 = vmul.f32 %v488, %v521
    %v549 = vmul.f32 %v494, %v521
    %v550 = vmul.f32 %v501, %v521
    %v551 = vmul.f32 %v507, %v521
    %v552 = vmul.f32 %v514, %v521
    %v553 = vmul.f32 %v520, %v521
    %v554 = vadd.f32 %v281, %v522
    %v555 = vadd.f32 %v282, %v523
    %v556 = vadd.f32 %v283, %v524
    %v557 = vadd.f32 %v284, %v525
    %v558 = vadd.f32 %v285, %v526
    %v559 = vadd.f32 %v286, %v527
    %v560 = vadd.f32 %v287, %v528
    %v561 = vadd.f32 %v288, %v529
    %v562 = vadd.f32 %v289, %v530
    %v563 = vadd.f32 %v290, %v531
    %v564 = vadd.f32 %v291, %v532
    %v565 = vadd.f32 %v292, %v533
    %v566 = vadd.f32 %v293, %v534
    %v567 = vadd.f32 %v294, %v535
    %v568 = vadd.f32 %v295, %v536
    %v569 = vadd.f32 %v296, %v537
    %v570 = vadd.f32 %v297, %v538
    %v571 = vadd.f32 %v298, %v539
    %v572 = vadd.f32 %v299, %v540
    %v573 = vadd.f32 %v300, %v541
    %v574 = vadd.f32 %v301, %v542
    %v575 = vadd.f32 %v302, %v543
    %v576 = vadd.f32 %v303, %v544
    %v577 = vadd.f32 %v304, %v545
    %v578 = vadd.f32 %v305, %v546
    %v579 = vadd.f32 %v306, %v547
    %v580 = vadd.f32 %v307, %v548
    %v581 = vadd.f32 %v308, %v549
    %v582 = vadd.f32 %v309, %v550
    %v583 = vadd.f32 %v310, %v551
    %v584 = vadd.f32 %v311, %v552
    %v585 = vadd.f32 %v312, %v553
    %v588 = vrot.slane %v70, 1
    %v589 = vrot.slane %v70, 2
    %v590 = vrot.slane %v70, 3
    %v591 = vrot.slane %v70, 4
    %v592 = vrot.slane %v70, 5
    %v593 = vrot.slane %v70, 6
    %v594 = vrot.slane %v70, 7
    %v595 = vrot.slane %v71, 1
    %v596 = vrot.slane %v71, 2
    %v597 = vrot.slane %v71, 3
    %v598 = vrot.slane %v71, 4
    %v599 = vrot.slane %v71, 5
    %v600 = vrot.slane %v71, 6
    %v601 = vrot.slane %v71, 7
    %v602 = vperm.slane %v70, 0
    %v603 = vperm.slane %v588, 0
    %v604 = vperm.slane %v589, 0
    %v605 = vperm.slane %v590, 0
    %v606 = vperm.slane %v591, 0
    %v607 = vperm.slane %v592, 0
    %v608 = vperm.slane %v593, 0
    %v609 = vperm.slane %v594, 0
    %v610 = vperm.slane %v71, 0
    %v611 = vperm.slane %v595, 0
    %v612 = vperm.slane %v596, 0
    %v613 = vperm.slane %v597, 0
    %v614 = vperm.slane %v598, 0
    %v615 = vperm.slane %v599, 0
    %v616 = vperm.slane %v600, 0
    %v617 = vperm.slane %v601, 0
    %v634 = vadd.f32 %v554, %v602
    %v635 = vadd.f32 %v555, %v602
    %v636 = vadd.f32 %v556, %v603
    %v637 = vadd.f32 %v557, %v603
    %v638 = vadd.f32 %v558, %v604
    %v639 = vadd.f32 %v559, %v604
    %v640 = vadd.f32 %v560, %v605
    %v641 = vadd.f32 %v561, %v605
    %v642 = vadd.f32 %v562, %v606
    %v643 = vadd.f32 %v563, %v606
    %v644 = vadd.f32 %v564, %v607
    %v645 = vadd.f32 %v565, %v607
    %v646 = vadd.f32 %v566, %v608
    %v647 = vadd.f32 %v567, %v608
    %v648 = vadd.f32 %v568, %v609
    %v649 = vadd.f32 %v569, %v609
    %v650 = vadd.f32 %v570, %v610
    %v651 = vadd.f32 %v571, %v610
    %v652 = vadd.f32 %v572, %v611
    %v653 = vadd.f32 %v573, %v611
    %v654 = vadd.f32 %v574, %v612
    %v655 = vadd.f32 %v575, %v612
    %v656 = vadd.f32 %v576, %v613
    %v657 = vadd.f32 %v577, %v613
    %v658 = vadd.f32 %v578, %v614
    %v659 = vadd.f32 %v579, %v614
    %v660 = vadd.f32 %v580, %v615
    %v661 = vadd.f32 %v581, %v615
    %v662 = vadd.f32 %v582, %v616
    %v663 = vadd.f32 %v583, %v616
    %v664 = vadd.f32 %v584, %v617
    %v665 = vadd.f32 %v585, %v617
    %v666 = vmax.f32 %v634, 0.0
    %v667 = vmax.f32 %v635, 0.0
    %v668 = vmax.f32 %v636, 0.0
    %v669 = vmax.f32 %v637, 0.0
    %v670 = vmax.f32 %v638, 0.0
    %v671 = vmax.f32 %v639, 0.0
    %v672 = vmax.f32 %v640, 0.0
    %v673 = vmax.f32 %v641, 0.0
    %v674 = vmax.f32 %v642, 0.0
    %v675 = vmax.f32 %v643, 0.0
    %v676 = vmax.f32 %v644, 0.0
    %v677 = vmax.f32 %v645, 0.0
    %v678 = vmax.f32 %v646, 0.0
    %v679 = vmax.f32 %v647, 0.0
    %v680 = vmax.f32 %v648, 0.0
    %v681 = vmax.f32 %v649, 0.0
    %v682 = vmax.f32 %v650, 0.0
    %v683 = vmax.f32 %v651, 0.0
    %v684 = vmax.f32 %v652, 0.0
    %v685 = vmax.f32 %v653, 0.0
    %v686 = vmax.f32 %v654, 0.0
    %v687 = vmax.f32 %v655, 0.0
    %v688 = vmax.f32 %v656, 0.0
    %v689 = vmax.f32 %v657, 0.0
    %v690 = vmax.f32 %v658, 0.0
    %v691 = vmax.f32 %v659, 0.0
    %v692 = vmax.f32 %v660, 0.0
    %v693 = vmax.f32 %v661, 0.0
    %v694 = vmax.f32 %v662, 0.0
    %v695 = vmax.f32 %v663, 0.0
    %v696 = vmax.f32 %v664, 0.0
    %v697 = vmax.f32 %v665, 0.0
    %v698 = vadd.f32 %v666, %v667
    %v699 = vrot.slane %v698, 4
    %v700 = vadd.f32 %v698, %v699
    %v701 = vrot.slane %v700, 2
    %v702 = vadd.f32 %v700, %v701
    %v703 = vrot.slane %v702, 1
    %v704 = vadd.f32 %v702, %v703
    %v705 = vadd.f32 %v668, %v669
    %v706 = vrot.slane %v705, 4
    %v707 = vadd.f32 %v705, %v706
    %v708 = vrot.slane %v707, 2
    %v709 = vadd.f32 %v707, %v708
    %v710 = vrot.slane %v709, 1
    %v711 = vadd.f32 %v709, %v710
    %v712 = vadd.f32 %v670, %v671
    %v713 = vrot.slane %v712, 4
    %v714 = vadd.f32 %v712, %v713
    %v715 = vrot.slane %v714, 2
    %v716 = vadd.f32 %v714, %v715
    %v717 = vrot.slane %v716, 1
    %v718 = vadd.f32 %v716, %v717
    %v719 = vadd.f32 %v672, %v673
    %v720 = vrot.slane %v719, 4
    %v721 = vadd.f32 %v719, %v720
    %v722 = vrot.slane %v721, 2
    %v723 = vadd.f32 %v721, %v722
    %v724 = vrot.slane %v723, 1
    %v725 = vadd.f32 %v723, %v724
    %v726 = vadd.f32 %v674, %v675
    %v727 = vrot.slane %v726, 4
    %v728 = vadd.f32 %v726, %v727
    %v729 = vrot.slane %v728, 2
    %v730 = vadd.f32 %v728, %v729
    %v731 = vrot.slane %v730, 1
    %v732 = vadd.f32 %v730, %v731
    %v733 = vadd.f32 %v676, %v677
    %v734 = vrot.slane %v733, 4
    %v735 = vadd.f32 %v733, %v734
    %v736 = vrot.slane %v735, 2
    %v737 = vadd.f32 %v735, %v736
    %v738 = vrot.slane %v737, 1
    %v739 = vadd.f32 %v737, %v738
    %v740 = vadd.f32 %v678, %v679
    %v741 = vrot.slane %v740, 4
    %v742 = vadd.f32 %v740, %v741
    %v743 = vrot.slane %v742, 2
    %v744 = vadd.f32 %v742, %v743
    %v745 = vrot.slane %v744, 1
    %v746 = vadd.f32 %v744, %v745
    %v747 = vadd.f32 %v680, %v681
    %v748 = vrot.slane %v747, 4
    %v749 = vadd.f32 %v747, %v748
    %v750 = vrot.slane %v749, 2
    %v751 = vadd.f32 %v749, %v750
    %v752 = vrot.slane %v751, 1
    %v753 = vadd.f32 %v751, %v752
    %v754 = vadd.f32 %v682, %v683
    %v755 = vrot.slane %v754, 4
    %v756 = vadd.f32 %v754, %v755
    %v757 = vrot.slane %v756, 2
    %v758 = vadd.f32 %v756, %v757
    %v759 = vrot.slane %v758, 1
    %v760 = vadd.f32 %v758, %v759
    %v761 = vadd.f32 %v684, %v685
    %v762 = vrot.slane %v761, 4
    %v763 = vadd.f32 %v761, %v762
    %v764 = vrot.slane %v763, 2
    %v765 = vadd.f32 %v763, %v764
    %v766 = vrot.slane %v765, 1
    %v767 = vadd.f32 %v765, %v766
    %v768 = vadd.f32 %v686, %v687
    %v769 = vrot.slane %v768, 4
    %v770 = vadd.f32 %v768, %v769
    %v771 = vrot.slane %v770, 2
    %v772 = vadd.f32 %v770, %v771
    %v773 = vrot.slane %v772, 1
    %v774 = vadd.f32 %v772, %v773
    %v775 = vadd.f32 %v688, %v689
    %v776 = vrot.slane %v775, 4
    %v777 = vadd.f32 %v775, %v776
    %v778 = vrot.slane %v777, 2
    %v779 = vadd.f32 %v777, %v778
    %v780 = vrot.slane %v779, 1
    %v781 = vadd.f32 %v779, %v780
    %v782 = vadd.f32 %v690, %v691
    %v783 = vrot.slane %v782, 4
    %v784 = vadd.f32 %v782, %v783
    %v785 = vrot.slane %v784, 2
    %v786 = vadd.f32 %v784, %v785
    %v787 = vrot.slane %v786, 1
    %v788 = vadd.f32 %v786, %v787
    %v789 = vadd.f32 %v692, %v693
    %v790 = vrot.slane %v789, 4
    %v791 = vadd.f32 %v789, %v790
    %v792 = vrot.slane %v791, 2
    %v793 = vadd.f32 %v791, %v792
    %v794 = vrot.slane %v793, 1
    %v795 = vadd.f32 %v793, %v794
    %v796 = vadd.f32 %v694, %v695
    %v797 = vrot.slane %v796, 4
    %v798 = vadd.f32 %v796, %v797
    %v799 = vrot.slane %v798, 2
    %v800 = vadd.f32 %v798, %v799
    %v801 = vrot.slane %v800, 1
    %v802 = vadd.f32 %v800, %v801
    %v803 = vadd.f32 %v696, %v697
    %v804 = vrot.slane %v803, 4
    %v805 = vadd.f32 %v803, %v804
    %v806 = vrot.slane %v805, 2
    %v807 = vadd.f32 %v805, %v806
    %v808 = vrot.slane %v807, 1
    %v809 = vadd.f32 %v807, %v808
    %v810 = vmul.f32 %v704, %v50
    %v811 = vmul.f32 %v711, %v50
    %v812 = vmul.f32 %v718, %v50
    %v813 = vmul.f32 %v725, %v50
    %v814 = vmul.f32 %v732, %v50
    %v815 = vmul.f32 %v739, %v50
    %v816 = vmul.f32 %v746, %v50
    %v817 = vmul.f32 %v753, %v50
    %v818 = vmul.f32 %v760, %v50
    %v819 = vmul.f32 %v767, %v50
    %v820 = vmul.f32 %v774, %v50
    %v821 = vmul.f32 %v781, %v50
    %v822 = vmul.f32 %v788, %v50
    %v823 = vmul.f32 %v795, %v50
    %v824 = vmul.f32 %v802, %v50
    %v825 = vmul.f32 %v809, %v50
    %v826 = vld [vmem:[%s3] sm:$0xff]
    %v827 = vld [vmem:[%s3 + $0x8] sm:$0xff]
    %v828 = vld [vmem:[%s3 + $0x10] sm:$0xff]
    %v829 = vld [vmem:[%s3 + $0x18] sm:$0xff]
    %v830 = vld [vmem:[%s3 + $0x20] sm:$0xff]
    %v831 = vld [vmem:[%s3 + $0x28] sm:$0xff]
    %v832 = vld [vmem:[%s3 + $0x30] sm:$0xff]
    %v833 = vld [vmem:[%s3 + $0x38] sm:$0xff]
    %v834 = vld [vmem:[%s3 + $0x40] sm:$0xff]
    %v835 = vld [vmem:[%s3 + $0x48] sm:$0xff]
    %v836 = vld [vmem:[%s3 + $0x50] sm:$0xff]
    %v837 = vld [vmem:[%s3 + $0x58] sm:$0xff]
    %v838 = vld [vmem:[%s3 + $0x60] sm:$0xff]
    %v839 = vld [vmem:[%s3 + $0x68] sm:$0xff]
    %v840 = vld [vmem:[%s3 + $0x70] sm:$0xff]
    %v841 = vld [vmem:[%s3 + $0x78] sm:$0xff]
    %v842 = vld [vmem:[%s3 + $0x80] sm:$0xff]
    %v843 = vld [vmem:[%s3 + $0x88] sm:$0xff]
    %v844 = vld [vmem:[%s3 + $0x90] sm:$0xff]
    %v845 = vld [vmem:[%s3 + $0x98] sm:$0xff]
    %v846 = vld [vmem:[%s3 + $0xa0] sm:$0xff]
    %v847 = vld [vmem:[%s3 + $0xa8] sm:$0xff]
    %v848 = vld [vmem:[%s3 + $0xb0] sm:$0xff]
    %v849 = vld [vmem:[%s3 + $0xb8] sm:$0xff]
    %v850 = vld [vmem:[%s3 + $0xc0] sm:$0xff]
    %v851 = vld [vmem:[%s3 + $0xc8] sm:$0xff]
    %v852 = vld [vmem:[%s3 + $0xd0] sm:$0xff]
    %v853 = vld [vmem:[%s3 + $0xd8] sm:$0xff]
    %v854 = vld [vmem:[%s3 + $0xe0] sm:$0xff]
    %v855 = vld [vmem:[%s3 + $0xe8] sm:$0xff]
    %v856 = vld [vmem:[%s3 + $0xf0] sm:$0xff]
    %v857 = vld [vmem:[%s3 + $0xf8] sm:$0xff]
    %v858 = vld [vmem:[%s3 + $0x100] sm:$0xff]
    %v859 = vld [vmem:[%s3 + $0x108] sm:$0xff]
    %v860 = vld [vmem:[%s3 + $0x110] sm:$0xff]
    %v861 = vld [vmem:[%s3 + $0x118] sm:$0xff]
    %v862 = vld [vmem:[%s3 + $0x120] sm:$0xff]
    %v863 = vld [vmem:[%s3 + $0x128] sm:$0xff]
    %v864 = vld [vmem:[%s3 + $0x130] sm:$0xff]
    %v865 = vld [vmem:[%s3 + $0x138] sm:$0xff]
    %v866 = vperm.slane %v34, 5
    %vm883 = vcmask 1041409
    %v884 = vsel %vm883, %v811, %v810
    %vm885 = vcmask 1042434
    %v886 = vsel %vm885, %v812, %v884
    %vm887 = vcmask 1043459
    %v888 = vsel %vm887, %v813, %v886
    %vm889 = vcmask 1044484
    %v890 = vsel %vm889, %v814, %v888
    %vm891 = vcmask 1045509
    %v892 = vsel %vm891, %v815, %v890
    %vm893 = vcmask 1046534
    %v894 = vsel %vm893, %v816, %v892
    %vm895 = vcmask 1047559
    %v896 = vsel %vm895, %v817, %v894
    %v897 = vsel %vm883, %v819, %v818
    %v898 = vsel %vm885, %v820, %v897
    %v899 = vsel %vm887, %v821, %v898
    %v900 = vsel %vm889, %v822, %v899
    %v901 = vsel %vm891, %v823, %v900
    %v902 = vsel %vm893, %v824, %v901
    %v903 = vsel %vm895, %v825, %v902
    %906 = vmatpush.msra.mxu0 %v841
    %907 = vmatpush.msra.mxu0 %v840
    %908 = vmatpush.msra.mxu0 %v839
    %909 = vmatpush.msra.mxu0 %v838
    %910 = vmatpush.msra.mxu0 %v837
    %911 = vmatpush.msra.mxu0 %v836
    %912 = vmatpush.msra.mxu0 %v835
    %913 = vmatpush.msra.mxu0 %v834
    %914 = vmatpush.msra.mxu0 %v833
    %915 = vmatpush.msra.mxu0 %v832
    %916 = vmatpush.msra.mxu0 %v831
    %917 = vmatpush.msra.mxu0 %v830
    %918 = vmatpush.msra.mxu0 %v829
    %919 = vmatpush.msra.mxu0 %v828
    %920 = vmatpush.msra.mxu0 %v827
    %921 = vmatpush.msra.mxu0 %v826
    %922 = vmatmul.f32.gmra.mxu0 %v896
    %v923 = vpop.f32.mrf.mxu0
    %v924 = vadd.f32 %v866, %v923
    %925 = vmatmul.f32.gmra.mxu0 %v903
    %v926 = vpop.f32.mrf.mxu0
    %v927 = vadd.f32 %v866, %v926
    %928 = vdwg.mxu0
    %vm929 = vcmask 785408
    %v930 = vsel %vm929, %v924, 0.0
    %v931 = vrot.slane %v930, 4
    %v932 = vadd.f32 %v930, %v931
    %v933 = vrot.slane %v932, 2
    %v934 = vadd.f32 %v932, %v933
    %v935 = vrot.slane %v934, 1
    %v936 = vadd.f32 %v934, %v935
    %v937 = vsel %vm929, %v927, 0.0
    %v938 = vrot.slane %v937, 4
    %v939 = vadd.f32 %v937, %v938
    %v940 = vrot.slane %v939, 2
    %v941 = vadd.f32 %v939, %v940
    %v942 = vrot.slane %v941, 1
    %v943 = vadd.f32 %v941, %v942
    %v944 = vrcp.pop 8.0
    %v945 = vmul.f32 8.0, %v944
    %v946 = vsub.f32 1.0, %v945
    %v947 = vmul.f32 %v944, %v946
    %v948 = vadd.f32 %v944, %v947
    %vm949 = vweird.f32 %v944
    %v950 = vsel %vm949, %v944, %v948
    %v951 = vmul.f32 %v936, %v950
    %v952 = vmul.f32 %v943, %v950
    %955 = vrot.lane.b32.xlu0 %v951, 96
    %v956 = vpop.permute.xlu0 %955
    %957 = vrot.lane.b32.xlu0 %v952, 96
    %v958 = vpop.permute.xlu0 %957
    %v961 = vsel %vm929, %v924, %v956
    %v962 = vsel %vm929, %v927, %v958
    %v963 = vperm.slane %v34, 6
    %vm964 = vcmask 523264
    %v965 = vsel %vm964, %v956, 0
    %v967 = vsel %vm964, %v958, 0
    %969 = vmatpush.msra.mxu0 %v857
    %970 = vmatpush.msra.mxu0 %v856
    %971 = vmatpush.msra.mxu0 %v855
    %972 = vmatpush.msra.mxu0 %v854
    %973 = vmatpush.msra.mxu0 %v853
    %974 = vmatpush.msra.mxu0 %v852
    %975 = vmatpush.msra.mxu0 %v851
    %976 = vmatpush.msra.mxu0 %v850
    %977 = vmatpush.msra.mxu0 %v849
    %978 = vmatpush.msra.mxu0 %v848
    %979 = vmatpush.msra.mxu0 %v847
    %980 = vmatpush.msra.mxu0 %v846
    %981 = vmatpush.msra.mxu0 %v845
    %982 = vmatpush.msra.mxu0 %v844
    %983 = vmatpush.msra.mxu0 %v843
    %984 = vmatpush.msra.mxu0 %v842
    %985 = vmatmul.f32.gmra.mxu0 %v961
    %v986 = vpop.f32.mrf.mxu0
    %v987 = vadd.f32 %v963, %v986
    %988 = vmatmul.f32.gmra.mxu0 %v962
    %v989 = vpop.f32.mrf.mxu0
    %v990 = vadd.f32 %v963, %v989
    %991 = vdwg.mxu0
    %992 = vmatpush.msra.mxu0 0.0
    %993 = vmatpush.msra.mxu0 0.0
    %994 = vmatpush.msra.mxu0 0.0
    %995 = vmatpush.msra.mxu0 0.0
    %996 = vmatpush.msra.mxu0 0.0
    %997 = vmatpush.msra.mxu0 0.0
    %998 = vmatpush.msra.mxu0 0.0
    %999 = vmatpush.msra.mxu0 0.0
    %1000 = vmatpush.msra.mxu0 %v865
    %1001 = vmatpush.msra.mxu0 %v864
    %1002 = vmatpush.msra.mxu0 %v863
    %1003 = vmatpush.msra.mxu0 %v862
    %1004 = vmatpush.msra.mxu0 %v861
    %1005 = vmatpush.msra.mxu0 %v860
    %1006 = vmatpush.msra.mxu0 %v859
    %1007 = vmatpush.msra.mxu0 %v858
    %1008 = vmatmul.f32.gmra.mxu0 %v965
    %v1009 = vpop.f32.mrf.mxu0
    %v1010 = vadd.f32 %v987, %v1009
    %1011 = vmatmul.f32.gmra.mxu0 %v967
    %v1012 = vpop.f32.mrf.mxu0
    %v1013 = vadd.f32 %v990, %v1012
    %1014 = vdwg.mxu0
    %v1015 = vmax.f32 %v1010, 0.0
    %v1016 = vmax.f32 %v1013, 0.0
    %v1017 = vsel %vm929, %v1015, 0.0
    %v1018 = vrot.slane %v1017, 4
    %v1019 = vadd.f32 %v1017, %v1018
    %v1020 = vrot.slane %v1019, 2
    %v1021 = vadd.f32 %v1019, %v1020
    %v1022 = vrot.slane %v1021, 1
    %v1023 = vadd.f32 %v1021, %v1022
    %v1024 = vsel %vm929, %v1016, 0.0
    %v1025 = vrot.slane %v1024, 4
    %v1026 = vadd.f32 %v1024, %v1025
    %v1027 = vrot.slane %v1026, 2
    %v1028 = vadd.f32 %v1026, %v1027
    %v1029 = vrot.slane %v1028, 1
    %v1030 = vadd.f32 %v1028, %v1029
    %v1031 = vmul.f32 %v1023, %v950
    %v1032 = vmul.f32 %v1030, %v950
    %v1033 = vld [vmem:[%s4] sm:$0xff]
    %v1034 = vld [vmem:[%s4 + $0x8] sm:$0xff]
    %v1035 = vld [vmem:[%s4 + $0x10] sm:$0xff]
    %v1036 = vld [vmem:[%s4 + $0x18] sm:$0xff]
    %v1037 = vld [vmem:[%s4 + $0x20] sm:$0xff]
    %v1038 = vld [vmem:[%s4 + $0x28] sm:$0xff]
    %v1039 = vld [vmem:[%s4 + $0x30] sm:$0xff]
    %v1040 = vld [vmem:[%s4 + $0x38] sm:$0xff]
    %v1041 = vld [vmem:[%s4 + $0x40] sm:$0xff]
    %v1042 = vld [vmem:[%s4 + $0x48] sm:$0xff]
    %v1043 = vld [vmem:[%s4 + $0x50] sm:$0xff]
    %v1044 = vld [vmem:[%s4 + $0x58] sm:$0xff]
    %v1045 = vld [vmem:[%s4 + $0x60] sm:$0xff]
    %v1046 = vld [vmem:[%s4 + $0x68] sm:$0xff]
    %v1047 = vld [vmem:[%s4 + $0x70] sm:$0xff]
    %v1048 = vld [vmem:[%s4 + $0x78] sm:$0xff]
    %v1049 = vld [vmem:[%s4 + $0x80] sm:$0xff]
    %v1050 = vld [vmem:[%s4 + $0x88] sm:$0xff]
    %v1051 = vld [vmem:[%s4 + $0x90] sm:$0xff]
    %v1052 = vld [vmem:[%s4 + $0x98] sm:$0xff]
    %v1053 = vld [vmem:[%s4 + $0xa0] sm:$0xff]
    %v1054 = vld [vmem:[%s4 + $0xa8] sm:$0xff]
    %v1055 = vld [vmem:[%s4 + $0xb0] sm:$0xff]
    %v1056 = vld [vmem:[%s4 + $0xb8] sm:$0xff]
    %v1057 = vperm.slane %v34, 7
    %v1058 = vperm.slane %v35, 7
    %v1061 = vsel %vm883, %v1032, %v1031
    %v1062 = vsel %vm929, %v1061, 0
    %1064 = vmatpush.msra.mxu0 0.0
    %1065 = vmatpush.msra.mxu0 0.0
    %1066 = vmatpush.msra.mxu0 0.0
    %1067 = vmatpush.msra.mxu0 0.0
    %1068 = vmatpush.msra.mxu0 %v1055
    %1069 = vmatpush.msra.mxu0 %v1053
    %1070 = vmatpush.msra.mxu0 %v1051
    %1071 = vmatpush.msra.mxu0 %v1049
    %1072 = vmatpush.msra.mxu0 %v1047
    %1073 = vmatpush.msra.mxu0 %v1045
    %1074 = vmatpush.msra.mxu0 %v1043
    %1075 = vmatpush.msra.mxu0 %v1041
    %1076 = vmatpush.msra.mxu0 %v1039
    %1077 = vmatpush.msra.mxu0 %v1037
    %1078 = vmatpush.msra.mxu0 %v1035
    %1079 = vmatpush.msra.mxu0 %v1033
    %1080 = vmatmul.f32.gmra.mxu0 %v1062
    %v1081 = vpop.f32.mrf.mxu0
    %v1082 = vadd.f32 %v1057, %v1081
    %1083 = vdwg.mxu0
    %1084 = vmatpush.msra.mxu0 0.0
    %1085 = vmatpush.msra.mxu0 0.0
    %1086 = vmatpush.msra.mxu0 0.0
    %1087 = vmatpush.msra.mxu0 0.0
    %1088 = vmatpush.msra.mxu0 %v1056
    %1089 = vmatpush.msra.mxu0 %v1054
    %1090 = vmatpush.msra.mxu0 %v1052
    %1091 = vmatpush.msra.mxu0 %v1050
    %1092 = vmatpush.msra.mxu0 %v1048
    %1093 = vmatpush.msra.mxu0 %v1046
    %1094 = vmatpush.msra.mxu0 %v1044
    %1095 = vmatpush.msra.mxu0 %v1042
    %1096 = vmatpush.msra.mxu0 %v1040
    %1097 = vmatpush.msra.mxu0 %v1038
    %1098 = vmatpush.msra.mxu0 %v1036
    %1099 = vmatpush.msra.mxu0 %v1034
    %1100 = vmatmul.f32.gmra.mxu0 %v1062
    %v1101 = vpop.f32.mrf.mxu0
    %v1102 = vadd.f32 %v1058, %v1101
    %1103 = vdwg.mxu0
    %v1104 = vld [vmem:[%s5] sm:$0xff]
    %v1105 = vld [vmem:[%s5 + $0x8] sm:$0xff]
    %v1106 = vld [vmem:[%s5 + $0x10] sm:$0xff]
    %v1107 = vld [vmem:[%s5 + $0x18] sm:$0xff]
    %v1108 = vld [vmem:[%s5 + $0x20] sm:$0xff]
    %v1109 = vld [vmem:[%s5 + $0x28] sm:$0xff]
    %v1110 = vld [vmem:[%s5 + $0x30] sm:$0xff]
    %v1111 = vld [vmem:[%s5 + $0x38] sm:$0xff]
    %v1112 = vld [vmem:[%s5 + $0x40] sm:$0xff]
    %v1113 = vld [vmem:[%s5 + $0x48] sm:$0xff]
    %v1114 = vld [vmem:[%s5 + $0x50] sm:$0xff]
    %v1115 = vld [vmem:[%s5 + $0x58] sm:$0xff]
    %v1116 = vld [vmem:[%s5 + $0x60] sm:$0xff]
    %v1117 = vld [vmem:[%s5 + $0x68] sm:$0xff]
    %v1118 = vld [vmem:[%s5 + $0x70] sm:$0xff]
    %v1119 = vld [vmem:[%s5 + $0x78] sm:$0xff]
    %v1120 = vld [vmem:[%s5 + $0x80] sm:$0xff]
    %v1121 = vld [vmem:[%s5 + $0x88] sm:$0xff]
    %v1122 = vperm.slane %v36, 0
    %v1124 = vsel %vm37, %v1102, 0
    %1126 = vmatpush.msra.mxu0 %v1119
    %1127 = vmatpush.msra.mxu0 %v1118
    %1128 = vmatpush.msra.mxu0 %v1117
    %1129 = vmatpush.msra.mxu0 %v1116
    %1130 = vmatpush.msra.mxu0 %v1115
    %1131 = vmatpush.msra.mxu0 %v1114
    %1132 = vmatpush.msra.mxu0 %v1113
    %1133 = vmatpush.msra.mxu0 %v1112
    %1134 = vmatpush.msra.mxu0 %v1111
    %1135 = vmatpush.msra.mxu0 %v1110
    %1136 = vmatpush.msra.mxu0 %v1109
    %1137 = vmatpush.msra.mxu0 %v1108
    %1138 = vmatpush.msra.mxu0 %v1107
    %1139 = vmatpush.msra.mxu0 %v1106
    %1140 = vmatpush.msra.mxu0 %v1105
    %1141 = vmatpush.msra.mxu0 %v1104
    %1142 = vmatmul.f32.gmra.mxu0 %v1082
    %v1143 = vpop.f32.mrf.mxu0
    %v1144 = vadd.f32 %v1122, %v1143
    %1145 = vdwg.mxu0
    %1146 = vmatpush.msra.mxu0 0.0
    %1147 = vmatpush.msra.mxu0 0.0
    %1148 = vmatpush.msra.mxu0 0.0
    %1149 = vmatpush.msra.mxu0 0.0
    %1150 = vmatpush.msra.mxu0 0.0
    %1151 = vmatpush.msra.mxu0 0.0
    %1152 = vmatpush.msra.mxu0 0.0
    %1153 = vmatpush.msra.mxu0 0.0
    %1154 = vmatpush.msra.mxu0 0.0
    %1155 = vmatpush.msra.mxu0 0.0
    %1156 = vmatpush.msra.mxu0 0.0
    %1157 = vmatpush.msra.mxu0 0.0
    %1158 = vmatpush.msra.mxu0 0.0
    %1159 = vmatpush.msra.mxu0 0.0
    %1160 = vmatpush.msra.mxu0 %v1121
    %1161 = vmatpush.msra.mxu0 %v1120
    %1162 = vmatmul.f32.gmra.mxu0 %v1124
    %v1163 = vpop.f32.mrf.mxu0
    %v1164 = vadd.f32 %v1144, %v1163
    %1165 = vdwg.mxu0
    %v1166 = vmax.f32 %v1164, 0.0
    %v1167 = vld [vmem:[%s6] sm:$0xff]
    %v1168 = vld [vmem:[%s6 + $0x8] sm:$0xff]
    %v1169 = vld [vmem:[%s6 + $0x10] sm:$0xff]
    %v1170 = vld [vmem:[%s6 + $0x18] sm:$0xff]
    %v1171 = vld [vmem:[%s6 + $0x20] sm:$0xff]
    %v1172 = vld [vmem:[%s6 + $0x28] sm:$0xff]
    %v1173 = vld [vmem:[%s6 + $0x30] sm:$0xff]
    %v1174 = vld [vmem:[%s6 + $0x38] sm:$0xff]
    %v1175 = vld [vmem:[%s6 + $0x40] sm:$0xff]
    %v1176 = vld [vmem:[%s6 + $0x48] sm:$0xff]
    %v1177 = vld [vmem:[%s6 + $0x50] sm:$0xff]
    %v1178 = vld [vmem:[%s6 + $0x58] sm:$0xff]
    %v1179 = vld [vmem:[%s6 + $0x60] sm:$0xff]
    %v1180 = vld [vmem:[%s6 + $0x68] sm:$0xff]
    %v1181 = vld [vmem:[%s6 + $0x70] sm:$0xff]
    %v1182 = vld [vmem:[%s6 + $0x78] sm:$0xff]
    %v1183 = vperm.slane %v36, 1
    %1184 = vmatpush.msra.mxu0 %v1182
    %1185 = vmatpush.msra.mxu0 %v1181
    %1186 = vmatpush.msra.mxu0 %v1180
    %1187 = vmatpush.msra.mxu0 %v1179
    %1188 = vmatpush.msra.mxu0 %v1178
    %1189 = vmatpush.msra.mxu0 %v1177
    %1190 = vmatpush.msra.mxu0 %v1176
    %1191 = vmatpush.msra.mxu0 %v1175
    %1192 = vmatpush.msra.mxu0 %v1174
    %1193 = vmatpush.msra.mxu0 %v1173
    %1194 = vmatpush.msra.mxu0 %v1172
    %1195 = vmatpush.msra.mxu0 %v1171
    %1196 = vmatpush.msra.mxu0 %v1170
    %1197 = vmatpush.msra.mxu0 %v1169
    %1198 = vmatpush.msra.mxu0 %v1168
    %1199 = vmatpush.msra.mxu0 %v1167
    %1200 = vmatmul.f32.gmra.mxu0 %v1166
    %v1201 = vpop.f32.mrf.mxu0
    %v1202 = vadd.f32 %v1183, %v1201
    %1203 = vdwg.mxu0
    %v1204 = vmax.f32 %v1202, 0.0
    %v1205 = vld [vmem:[%s7] sm:$0xff]
    %v1206 = vld [vmem:[%s7 + $0x8] sm:$0xff]
    %v1207 = vld [vmem:[%s7 + $0x10] sm:$0xff]
    %v1208 = vld [vmem:[%s7 + $0x18] sm:$0xff]
    %v1209 = vld [vmem:[%s7 + $0x20] sm:$0xff]
    %v1210 = vld [vmem:[%s7 + $0x28] sm:$0xff]
    %v1211 = vld [vmem:[%s7 + $0x30] sm:$0xff]
    %v1212 = vld [vmem:[%s7 + $0x38] sm:$0xff]
    %v1213 = vperm.slane %v36, 2
    %v1215 = vsel %vm964, %v1204, 0
    %1217 = vmatpush.msra.mxu0 0.0
    %1218 = vmatpush.msra.mxu0 0.0
    %1219 = vmatpush.msra.mxu0 0.0
    %1220 = vmatpush.msra.mxu0 0.0
    %1221 = vmatpush.msra.mxu0 0.0
    %1222 = vmatpush.msra.mxu0 0.0
    %1223 = vmatpush.msra.mxu0 0.0
    %1224 = vmatpush.msra.mxu0 0.0
    %1225 = vmatpush.msra.mxu0 %v1212
    %1226 = vmatpush.msra.mxu0 %v1211
    %1227 = vmatpush.msra.mxu0 %v1210
    %1228 = vmatpush.msra.mxu0 %v1209
    %1229 = vmatpush.msra.mxu0 %v1208
    %1230 = vmatpush.msra.mxu0 %v1207
    %1231 = vmatpush.msra.mxu0 %v1206
    %1232 = vmatpush.msra.mxu0 %v1205
    %1233 = vmatmul.f32.gmra.mxu0 %v1215
    %v1234 = vpop.f32.mrf.mxu0
    %v1235 = vadd.f32 %v1213, %v1234
    %1236 = vdwg.mxu0
    %vm1237 = vcmask 17408
    %1238 = vst.msk [vmem:[#allocation2] sm:$0x3] %vm1237, %v1235
    // Predicated region
    $region34: #{forward.1} parent=1 // pred_check
      _
    $region35: #{forward.1} parent=1 // pred_check_branch
      %1240 = sbr.rel (0) target = $region37
    $region36: #{forward.1} parent=1 // pred_region
      %1242 = vsyncadd [#allocation3], 0
      %s1244 = sshll.u32 [#allocation2], 4
      %s1245 = int_to_ptr.vmem [resolvable:$true] %s1244
      %s1246 = sshll.u32 %s8, 4
      %s1247 = int_to_ptr.hbm [resolvable:$true] %s1246
      %1249 = dma.vmem_to_hbm [thread:$0]  %s1245, 32, %s1247, [#allocation3]
    $region37: #{forward.1} parent=1 // pred_fallthru
      _
    // Predicated region
    $region38: #{forward.1} parent=1 // pred_check
      _
    $region39: #{forward.1} parent=1 // pred_check_branch
      %1251 = sbr.rel (0) target = $region41
    $region40: #{forward.1} parent=1 // pred_region
      %1253 = dma.done [#allocation3], 32
    $region41: #{forward.1} parent=1 // pred_fallthru
      _
    %1254 = vsyncpa [#allocation3], 1

</llo_original>
